<compile_context>
chip_gen: v7x
topology: tpu7x:2x2x1
jax: 0.10.0
libtpu: 0.0.40
codegen_flags: <defaults>
</compile_context>

<pallas_src>
import functools
import math

import jax
import jax.numpy as jnp
from jax.experimental import pallas as pl
from jax.experimental.pallas import tpu as pltpu

LANE = 128


def _round_up(x, m):
    return ((x + m - 1) // m) * m


def _choose_tile_b(B):
    """Batch tile: <=1024 rows, >=2 grid steps when feasible (v7x dual-TC),
    multiple of 16 (bf16 sublane pack), minimal last-tile padding."""
    if B <= 16:
        return 16
    n_tiles = max(2, pl.cdiv(B, 1024))
    return _round_up(pl.cdiv(B, n_tiles), 16)


def _actor_critic_kernel(
    x_ref,           # (TILE_B, S_in)          bf16 state tile (narrow K)
    w1_ref, b1_ref,  # (S_in, H_pad) bf16, (1, H_pad) f32
    w2_ref, b2_ref,  # (H_pad, H_pad) bf16, (1, H_pad) f32
    wh_ref, bh_ref,  # fused head: (H_pad, LANE + H_pad) bf16, (1, LANE + H_pad) f32
    wc2_ref,         # (1, H_pad) f32  -- critic output weight as a row vector
    bout_ref,        # (1, LANE)  f32  -- packed-output bias (bc2 sits in lane A)
    out_ref,         # (TILE_B, LANE) bf16 packed output: [mean | value | zeros]
    *, action_dim,
):
    x = x_ref[...]   # already bf16

    # feature extractor: Linear -> ReLU -> Linear -> ReLU   (MXU, f32 accumulate)
    h1 = jnp.dot(x, w1_ref[...], preferred_element_type=jnp.float32) + b1_ref[...]
    h1 = jnp.maximum(h1, 0.0).astype(jnp.bfloat16)
    h2 = jnp.dot(h1, w2_ref[...], preferred_element_type=jnp.float32) + b2_ref[...]
    h2 = jnp.maximum(h2, 0.0).astype(jnp.bfloat16)

    # fused head: one wide MXU pass produces [actor_mean (lanes 0:A) | critic h]
    head = jnp.dot(h2, wh_ref[...], preferred_element_type=jnp.float32) + bh_ref[...]
    mean_block = head[:, :LANE]                 # lanes 0:A = mean, rest exactly 0
    c1 = jnp.maximum(head[:, LANE:], 0.0)       # (TILE_B, H_pad) critic hidden

    # value = c1 @ wc2 done as VPU multiply + XLU lane reduction (avoid N=1 MXU pass)
    value = jnp.sum(c1 * wc2_ref[...], axis=-1, keepdims=True)   # (TILE_B, 1) f32

    # pack: lane A <- value, lanes 0:A <- mean, add bc2 via bout (lane A), rest 0
    lane = jax.lax.broadcasted_iota(jnp.int32, mean_block.shape, 1)
    packed = jnp.where(lane == action_dim, value, mean_block) + bout_ref[...]
    out_ref[...] = packed.astype(jnp.bfloat16)   # bf16 slab halves HBM writeback


def init_params(key, state_dim, action_dim, hidden_dim=128):
    """Mirrors nn.Linear's U(-1/sqrt(in), 1/sqrt(in)) init.

    Weights stored pre-transposed as (in_dim, out_dim); biases as (1, out_dim).
    """
    def linear(key, in_dim, out_dim):
        kw, kb = jax.random.split(key)
        bound = 1.0 / math.sqrt(in_dim)
        w = jax.random.uniform(kw, (in_dim, out_dim), jnp.float32, -bound, bound)
        b = jax.random.uniform(kb, (1, out_dim), jnp.float32, -bound, bound)
        return w, b

    keys = jax.random.split(key, 5)
    w1, b1 = linear(keys[0], state_dim, hidden_dim)
    w2, b2 = linear(keys[1], hidden_dim, hidden_dim)
    wm, bm = linear(keys[2], hidden_dim, action_dim)
    wc1, bc1 = linear(keys[3], hidden_dim, hidden_dim)
    wc2, bc2 = linear(keys[4], hidden_dim, 1)
    log_std = jnp.zeros((1, action_dim), jnp.float32)

    return dict(w1=w1, b1=b1, w2=w2, b2=b2, wm=wm, bm=bm, log_std=log_std,
                wc1=wc1, bc1=bc1, wc2=wc2, bc2=bc2)


def prepare_params(params, state_dim, action_dim, hidden_dim):
    """One-time: pad hidden dims to lane multiples, keep K narrow (32-multiple),
    fuse heads, cast matmul weights to bf16."""
    S_in = _round_up(state_dim, 32)       # bf16 sublane pack; NOT inflated to 128
    H_pad = _round_up(hidden_dim, LANE)
    A = action_dim
    assert A < LANE, "action_dim must fit in one lane group with the value slot"

    def pad2(w, rows, cols):
        return jnp.pad(w, ((0, rows - w.shape[0]), (0, cols - w.shape[1])))

    w1 = pad2(params["w1"], S_in, H_pad).astype(jnp.bfloat16)
    b1 = pad2(params["b1"], 1, H_pad)
    w2 = pad2(params["w2"], H_pad, H_pad).astype(jnp.bfloat16)
    b2 = pad2(params["b2"], 1, H_pad)

    # Fused head weight: [ actor_mean (padded to LANE cols) | critic layer-1 ]
    wm_pad = pad2(params["wm"], H_pad, LANE)
    wc1_pad = pad2(params["wc1"], H_pad, H_pad)
    w_head = jnp.concatenate([wm_pad, wc1_pad], axis=1).astype(jnp.bfloat16)
    b_head = jnp.concatenate([pad2(params["bm"], 1, LANE),
                              pad2(params["bc1"], 1, H_pad)], axis=1)

    wc2_row = pad2(params["wc2"].T, 1, H_pad)                       # (1, H_pad) f32
    b_out = jnp.zeros((1, LANE), jnp.float32).at[0, A].set(params["bc2"][0, 0])

    return dict(w1=w1, b1=b1, w2=w2, b2=b2, w_head=w_head, b_head=b_head,
                wc2_row=wc2_row, b_out=b_out, log_std=params["log_std"],
                state_dim=state_dim, action_dim=A, S_in=S_in, H_pad=H_pad)


def actor_critic_forward(state, pp):
    """Fused ActorCritic forward. Returns (action_mean, action_std, value)."""
    B, state_dim = state.shape
    A = pp["action_dim"]
    S_in = pp["S_in"]

    TILE_B = _choose_tile_b(B)
    B_pad = _round_up(B, TILE_B)

    # Narrow bf16 input stream (no 128-lane f32 inflation); pad only if needed.
    x = state.astype(jnp.bfloat16)
    if B_pad != B or S_in != state_dim:
        x = jnp.pad(x, ((0, B_pad - B), (0, S_in - state_dim)))

    kernel = functools.partial(_actor_critic_kernel, action_dim=A)

    def const_spec(arr):
        # Full-array block, constant index_map -> loaded once, VMEM-resident.
        # (Weights are ~260 KiB here, far below any scoped-VMEM limit.)
        return pl.BlockSpec(arr.shape, lambda i, _n=arr.ndim: (0,) * _n)

    weights = (pp["w1"], pp["b1"], pp["w2"], pp["b2"],
               pp["w_head"], pp["b_head"], pp["wc2_row"], pp["b_out"])

    out = pl.pallas_call(
        kernel,
        out_shape=jax.ShapeDtypeStruct((B_pad, LANE), jnp.bfloat16),
        grid=(B_pad // TILE_B,),
        in_specs=[pl.BlockSpec((TILE_B, S_in), lambda i: (i, 0))]
                 + [const_spec(w) for w in weights],
        out_specs=pl.BlockSpec((TILE_B, LANE), lambda i: (i, 0)),
        compiler_params=pltpu.CompilerParams(
            dimension_semantics=("parallel",)),   # shard batch over v7x dual TCs
    )(x, *weights)

    # Single slice of the packed slab, then split (one XLA slice, not two).
    packed = out[:B, :A + 1].astype(jnp.float32)
    action_mean = packed[:, :A]
    value = packed[:, A:]
    action_std = jnp.exp(pp["log_std"])           # batch-independent -> wrapper
    return action_mean, action_std, value


def _reference_forward(state, p):
    h1 = jnp.maximum(state @ p["w1"] + p["b1"], 0.0)
    h2 = jnp.maximum(h1 @ p["w2"] + p["b2"], 0.0)
    mean = h2 @ p["wm"] + p["bm"]
    std = jnp.exp(p["log_std"])
    c1 = jnp.maximum(h2 @ p["wc1"] + p["bc1"], 0.0)
    value = c1 @ p["wc2"] + p["bc2"]
    return mean, std, value


if __name__ == "__main__":
    # Small shapes consistent with the module's forward.
    B, STATE_DIM, ACTION_DIM, HIDDEN_DIM = 8, 16, 4, 32

    key = jax.random.PRNGKey(0)
    k_state, k_params = jax.random.split(key)

    state = jax.random.normal(k_state, (B, STATE_DIM), jnp.float32)
    params = init_params(k_params, STATE_DIM, ACTION_DIM, HIDDEN_DIM)
    prepared = prepare_params(params, STATE_DIM, ACTION_DIM, HIDDEN_DIM)

    action_mean, action_std, value = jax.block_until_ready(
        actor_critic_forward(state, prepared)
    )

    # Sanity check against a pure-JAX f32 reference (kernel uses bf16 matmuls,
    # bf16 I/O, f32 accumulation -> compare with a bf16-appropriate tolerance).
    ref_mean, ref_std, ref_value = _reference_forward(state, params)
    assert action_mean.shape == (B, ACTION_DIM)
    assert action_std.shape == (1, ACTION_DIM)
    assert value.shape == (B, 1)
    assert jnp.allclose(action_mean, ref_mean, atol=3e-2, rtol=3e-2)
    assert jnp.allclose(action_std, ref_std, atol=1e-6)
    assert jnp.allclose(value, ref_value, atol=3e-2, rtol=3e-2)

    print("KERNEL_OK")
</pallas_src>

<mosaic_0001>
module attributes {stable_mosaic.version = 11 : i64} {
  func.func @_actor_critic_kernel(%arg0: i32, %arg1: memref<16x32xbf16, #tpu.memory_space<vmem>>, %arg2: memref<32x128xbf16, #tpu.memory_space<vmem>>, %arg3: memref<1x128xf32, #tpu.memory_space<vmem>>, %arg4: memref<128x128xbf16, #tpu.memory_space<vmem>>, %arg5: memref<1x128xf32, #tpu.memory_space<vmem>>, %arg6: memref<128x256xbf16, #tpu.memory_space<vmem>>, %arg7: memref<1x256xf32, #tpu.memory_space<vmem>>, %arg8: memref<1x128xf32, #tpu.memory_space<vmem>>, %arg9: memref<1x128xf32, #tpu.memory_space<vmem>>, %arg10: memref<16x128xbf16, #tpu.memory_space<vmem>>) attributes {dimension_semantics = [#tpu.dimension_semantics<parallel>], iteration_bounds = array<i64: 1>, scalar_prefetch = 0 : i64, scratch_operands = 0 : i64, tpu.core_type = #tpu.core_type<tc>, window_params = [{transform_indices = @transform_0, window_bounds = array<i64: 16, 32>}, {pipeline_mode = #tpu.pipeline_mode<synchronous>, transform_indices = @transform_1, window_bounds = array<i64: 32, 128>}, {pipeline_mode = #tpu.pipeline_mode<synchronous>, transform_indices = @transform_2, window_bounds = array<i64: 1, 128>}, {pipeline_mode = #tpu.pipeline_mode<synchronous>, transform_indices = @transform_3, window_bounds = array<i64: 128, 128>}, {pipeline_mode = #tpu.pipeline_mode<synchronous>, transform_indices = @transform_4, window_bounds = array<i64: 1, 128>}, {pipeline_mode = #tpu.pipeline_mode<synchronous>, transform_indices = @transform_5, window_bounds = array<i64: 128, 256>}, {pipeline_mode = #tpu.pipeline_mode<synchronous>, transform_indices = @transform_6, window_bounds = array<i64: 1, 256>}, {pipeline_mode = #tpu.pipeline_mode<synchronous>, transform_indices = @transform_7, window_bounds = array<i64: 1, 128>}, {pipeline_mode = #tpu.pipeline_mode<synchronous>, transform_indices = @transform_8, window_bounds = array<i64: 1, 128>}, {transform_indices = @transform_9, window_bounds = array<i64: 16, 128>}]} {
    %c0 = arith.constant 0 : index
    %c0_0 = arith.constant 0 : index
    %0 = vector.load %arg1[%c0, %c0_0] : memref<16x32xbf16, #tpu.memory_space<vmem>>, vector<16x32xbf16>
    %c0_1 = arith.constant 0 : index
    %c0_2 = arith.constant 0 : index
    %1 = vector.load %arg2[%c0_1, %c0_2] : memref<32x128xbf16, #tpu.memory_space<vmem>>, vector<32x128xbf16>
    %cst = arith.constant dense<0.000000e+00> : vector<16x128xf32>
    %2 = tpu.matmul %0, %1, %cst {dimension_numbers = #tpu.dot_dimension_numbers<[1], [0], [0], [1], [0, 0, 1, 1], [], []>} : vector<16x32xbf16>, vector<32x128xbf16>, vector<16x128xf32> -> vector<16x128xf32>
    %c0_3 = arith.constant 0 : index
    %c0_4 = arith.constant 0 : index
    %3 = vector.load %arg3[%c0_3, %c0_4] : memref<1x128xf32, #tpu.memory_space<vmem>>, vector<1x128xf32>
    %4 = vector.broadcast %3 : vector<1x128xf32> to vector<16x128xf32>
    %5 = arith.addf %2, %4 : vector<16x128xf32>
    %cst_5 = arith.constant 0.000000e+00 : f32
    %6 = vector.broadcast %cst_5 : f32 to vector<16x128xf32>
    %7 = arith.maximumf %5, %6 : vector<16x128xf32>
    %8 = arith.truncf %7 : vector<16x128xf32> to vector<16x128xbf16>
    %c0_6 = arith.constant 0 : index
    %c0_7 = arith.constant 0 : index
    %9 = vector.load %arg4[%c0_6, %c0_7] : memref<128x128xbf16, #tpu.memory_space<vmem>>, vector<128x128xbf16>
    %cst_8 = arith.constant dense<0.000000e+00> : vector<16x128xf32>
    %10 = tpu.matmul %8, %9, %cst_8 {dimension_numbers = #tpu.dot_dimension_numbers<[1], [0], [0], [1], [0, 0, 1, 1], [], []>} : vector<16x128xbf16>, vector<128x128xbf16>, vector<16x128xf32> -> vector<16x128xf32>
    %c0_9 = arith.constant 0 : index
    %c0_10 = arith.constant 0 : index
    %11 = vector.load %arg5[%c0_9, %c0_10] : memref<1x128xf32, #tpu.memory_space<vmem>>, vector<1x128xf32>
    %12 = vector.broadcast %11 : vector<1x128xf32> to vector<16x128xf32>
    %13 = arith.addf %10, %12 : vector<16x128xf32>
    %cst_11 = arith.constant 0.000000e+00 : f32
    %14 = vector.broadcast %cst_11 : f32 to vector<16x128xf32>
    %15 = arith.maximumf %13, %14 : vector<16x128xf32>
    %16 = arith.truncf %15 : vector<16x128xf32> to vector<16x128xbf16>
    %c0_12 = arith.constant 0 : index
    %c0_13 = arith.constant 0 : index
    %17 = vector.load %arg6[%c0_12, %c0_13] : memref<128x256xbf16, #tpu.memory_space<vmem>>, vector<128x256xbf16>
    %cst_14 = arith.constant dense<0.000000e+00> : vector<16x256xf32>
    %18 = tpu.matmul %16, %17, %cst_14 {dimension_numbers = #tpu.dot_dimension_numbers<[1], [0], [0], [1], [0, 0, 1, 1], [], []>} : vector<16x128xbf16>, vector<128x256xbf16>, vector<16x256xf32> -> vector<16x256xf32>
    %c0_15 = arith.constant 0 : index
    %c0_16 = arith.constant 0 : index
    %19 = vector.load %arg7[%c0_15, %c0_16] : memref<1x256xf32, #tpu.memory_space<vmem>>, vector<1x256xf32>
    %20 = vector.broadcast %19 : vector<1x256xf32> to vector<16x256xf32>
    %21 = arith.addf %18, %20 : vector<16x256xf32>
    %22 = vector.extract_strided_slice %21 {offsets = [0, 0], sizes = [16, 128], strides = [1, 1]} : vector<16x256xf32> to vector<16x128xf32>
    %23 = vector.extract_strided_slice %21 {offsets = [0, 128], sizes = [16, 128], strides = [1, 1]} : vector<16x256xf32> to vector<16x128xf32>
    %cst_17 = arith.constant 0.000000e+00 : f32
    %24 = vector.broadcast %cst_17 : f32 to vector<16x128xf32>
    %25 = arith.maximumf %23, %24 : vector<16x128xf32>
    %c0_18 = arith.constant 0 : index
    %c0_19 = arith.constant 0 : index
    %26 = vector.load %arg8[%c0_18, %c0_19] : memref<1x128xf32, #tpu.memory_space<vmem>>, vector<1x128xf32>
    %27 = vector.broadcast %26 : vector<1x128xf32> to vector<16x128xf32>
    %28 = arith.mulf %25, %27 : vector<16x128xf32>
    %cst_20 = arith.constant dense<0.000000e+00> : vector<16xf32>
    %29 = vector.multi_reduction <add>, %28, %cst_20 [1] : vector<16x128xf32> to vector<16xf32>
    %30 = vector.shape_cast %29 : vector<16xf32> to vector<16x1xf32>
    %31 = tpu.iota {dimensions = array<i32: 1>} : vector<16x128xi32>
    %c4_i32 = arith.constant 4 : i32
    %32 = vector.broadcast %c4_i32 : i32 to vector<16x128xi32>
    %33 = arith.cmpi eq, %31, %32 : vector<16x128xi32>
    %34 = vector.shape_cast %30 : vector<16x1xf32> to vector<16x1xf32>
    %35 = vector.broadcast %34 : vector<16x1xf32> to vector<16x128xf32>
    %36 = arith.select %33, %35, %22 : vector<16x128xi1>, vector<16x128xf32>
    %c0_21 = arith.constant 0 : index
    %c0_22 = arith.constant 0 : index
    %37 = vector.load %arg9[%c0_21, %c0_22] : memref<1x128xf32, #tpu.memory_space<vmem>>, vector<1x128xf32>
    %38 = vector.broadcast %37 : vector<1x128xf32> to vector<16x128xf32>
    %39 = arith.addf %36, %38 : vector<16x128xf32>
    %40 = arith.truncf %39 : vector<16x128xf32> to vector<16x128xbf16>
    %c0_23 = arith.constant 0 : index
    %c0_24 = arith.constant 0 : index
    %41 = vector.load %arg10[%c0_23, %c0_24] : memref<16x128xbf16, #tpu.memory_space<vmem>>, vector<16x128xbf16>
    tpu.vector_store %arg10[%c0_23, %c0_24], %40 {strides = array<i32>} : memref<16x128xbf16, #tpu.memory_space<vmem>>, vector<16x128xbf16>,
    return
  }
  func.func @transform_0(%arg0: i32) -> (i32, i32) {
    %c0_i32 = arith.constant 0 : i32
    %c0_i32_0 = arith.constant 0 : i32
    return %arg0, %c0_i32 : i32, i32
  }
  func.func @transform_1(%arg0: i32) -> (i32, i32) {
    %c0_i32 = arith.constant 0 : i32
    %c0_i32_0 = arith.constant 0 : i32
    %c0_i32_1 = arith.constant 0 : i32
    return %c0_i32, %c0_i32_0 : i32, i32
  }
  func.func @transform_2(%arg0: i32) -> (i32, i32) {
    %c0_i32 = arith.constant 0 : i32
    %c0_i32_0 = arith.constant 0 : i32
    %c0_i32_1 = arith.constant 0 : i32
    return %c0_i32, %c0_i32_0 : i32, i32
  }
  func.func @transform_3(%arg0: i32) -> (i32, i32) {
    %c0_i32 = arith.constant 0 : i32
    %c0_i32_0 = arith.constant 0 : i32
    %c0_i32_1 = arith.constant 0 : i32
    return %c0_i32, %c0_i32_0 : i32, i32
  }
  func.func @transform_4(%arg0: i32) -> (i32, i32) {
    %c0_i32 = arith.constant 0 : i32
    %c0_i32_0 = arith.constant 0 : i32
    %c0_i32_1 = arith.constant 0 : i32
    return %c0_i32, %c0_i32_0 : i32, i32
  }
  func.func @transform_5(%arg0: i32) -> (i32, i32) {
    %c0_i32 = arith.constant 0 : i32
    %c0_i32_0 = arith.constant 0 : i32
    %c0_i32_1 = arith.constant 0 : i32
    return %c0_i32, %c0_i32_0 : i32, i32
  }
  func.func @transform_6(%arg0: i32) -> (i32, i32) {
    %c0_i32 = arith.constant 0 : i32
    %c0_i32_0 = arith.constant 0 : i32
    %c0_i32_1 = arith.constant 0 : i32
    return %c0_i32, %c0_i32_0 : i32, i32
  }
  func.func @transform_7(%arg0: i32) -> (i32, i32) {
    %c0_i32 = arith.constant 0 : i32
    %c0_i32_0 = arith.constant 0 : i32
    %c0_i32_1 = arith.constant 0 : i32
    return %c0_i32, %c0_i32_0 : i32, i32
  }
  func.func @transform_8(%arg0: i32) -> (i32, i32) {
    %c0_i32 = arith.constant 0 : i32
    %c0_i32_0 = arith.constant 0 : i32
    %c0_i32_1 = arith.constant 0 : i32
    return %c0_i32, %c0_i32_0 : i32, i32
  }
  func.func @transform_9(%arg0: i32) -> (i32, i32) {
    %c0_i32 = arith.constant 0 : i32
    %c0_i32_0 = arith.constant 0 : i32
    return %arg0, %c0_i32 : i32, i32
  }
}

</mosaic_0001>

<llo_original>
// kernel: tpu_custom_call.1
$region0: #{tpu_custom_call.1}
  #allocation0 [shape = 'u32[]', space=smem, size = 0x4, offset = 0x4, fixed_abs, tag = 'smem constant byte address 0x4 - core index']
  #allocation1 [shape = 'u32[144,128]{1,0:T(1,128)}', space=vmem, size = 0x12000, scoped, tag = 'internal scratch']
  %s0 = inlined_call_operand.hbm [shape: bf16[16,32], index: 0, kind: input, shape index: {}]
  %s1 = inlined_call_operand.hbm [shape: bf16[32,128], index: 1, kind: input, shape index: {}]
  %s2 = inlined_call_operand.vmem [shape: f32[1,128], index: 2, kind: input, shape index: {}]
  %s3 = inlined_call_operand.hbm [shape: bf16[128,128], index: 3, kind: input, shape index: {}]
  %s4 = inlined_call_operand.vmem [shape: f32[1,128], index: 4, kind: input, shape index: {}]
  %s5 = inlined_call_operand.hbm [shape: bf16[128,256], index: 5, kind: input, shape index: {}]
  %s6 = inlined_call_operand.vmem [shape: f32[1,256], index: 6, kind: input, shape index: {}]
  %s7 = inlined_call_operand.vmem [shape: f32[1,128], index: 7, kind: input, shape index: {}]
  %s8 = inlined_call_operand.vmem [shape: f32[1,128], index: 8, kind: input, shape index: {}]
  %s9 = inlined_call_operand.hbm [shape: bf16[16,128], index: 9, kind: output, shape index: {}]
  %s10 = sld [smem:[#allocation0]]
  $region62: #{tpu_custom_call.1} parent=0
    _
  %s12 = ssub.s32 1, %s10
  %s13 = scalar_select 0, %s12, %s10
  $region1: #{tpu_custom_call.1} parent=0
    #allocation2 [shape = 'u8[4096]{0}', space=vmem, size = 0x1000, scoped, tag = 'input window, operand 0, single buffered']
    #allocation3 [shape = 's32[1]{0}', space=sflag, size = 0x4, scoped, tag = 'scoped memory for tpu_custom_call.1']
    #allocation4 [shape = 's32[1]{0}', space=sflag, size = 0x4, scoped, tag = 'scoped memory for tpu_custom_call.1']
    #allocation5 [shape = 'u8[8192]{0}', space=vmem, size = 0x2000, scoped, tag = 'input window, operand 1, single buffered']
    #allocation6 [shape = 's32[1]{0}', space=sflag, size = 0x4, scoped, tag = 'scoped memory for tpu_custom_call.1']
    #allocation7 [shape = 'u8[32768]{0}', space=vmem, size = 0x8000, scoped, tag = 'input window, operand 3, single buffered']
    #allocation8 [shape = 'u8[65536]{0}', space=vmem, size = 0x10000, scoped, tag = 'input window, operand 5, single buffered']
    #allocation9 [shape = 's32[1]{0}', space=sflag, size = 0x4, scoped, tag = 'scoped memory for tpu_custom_call.1']
    #allocation10 [shape = 'u8[4096]{0}', space=vmem, size = 0x1000, scoped, tag = 'output window, operand 0, single buffered']
    %14 = vsyncpa [#allocation3], 0
    %15 = vsyncpa [#allocation6], 0
    %16 = vsyncpa [#allocation9], 0
    %17 = vsyncpa [#allocation4], 0
    // Predicated region
    $region2: #{tpu_custom_call.1} parent=1 // pred_check
      _
    $region3: #{tpu_custom_call.1} parent=1 // pred_check_branch
      %19 = sbr.rel (0) target = $region5
    $region4: #{tpu_custom_call.1} parent=1 // pred_region
      %s21 = ssub.s32 128, 128
      %22 = vsyncadd [#allocation3], %s21
      %s23 = sshll.u32 [#allocation2], 4
      %s24 = int_to_ptr.vmem [resolvable:$true] %s23
      %29 = dma.hbm_to_vmem [thread:$0]  %s0, 128, %s24, [#allocation3], 64, 64, 4
    $region5: #{tpu_custom_call.1} parent=1 // pred_fallthru
      _
    // Predicated region
    $region6: #{tpu_custom_call.1} parent=1 // pred_check
      _
    $region7: #{tpu_custom_call.1} parent=1 // pred_check_branch
      %31 = sbr.rel (0) target = $region9
    $region8: #{tpu_custom_call.1} parent=1 // pred_region
      %s33 = ssub.s32 256, 256
      %34 = vsyncadd [#allocation6], %s33
      %s35 = sshll.u32 [#allocation5], 4
      %s36 = int_to_ptr.vmem [resolvable:$true] %s35
      %41 = dma.hbm_to_vmem [thread:$0]  %s1, 256, %s36, [#allocation6], 64, 64, 4
    $region9: #{tpu_custom_call.1} parent=1 // pred_fallthru
      _
    // Predicated region
    $region10: #{tpu_custom_call.1} parent=1 // pred_check
      _
    $region11: #{tpu_custom_call.1} parent=1 // pred_check_branch
      %43 = sbr.rel (0) target = $region13
    $region12: #{tpu_custom_call.1} parent=1 // pred_region
      _
    $region13: #{tpu_custom_call.1} parent=1 // pred_fallthru
      _
    // Predicated region
    $region14: #{tpu_custom_call.1} parent=1 // pred_check
      _
    $region15: #{tpu_custom_call.1} parent=1 // pred_check_branch
      %45 = sbr.rel (0) target = $region17
    $region16: #{tpu_custom_call.1} parent=1 // pred_region
      %s47 = ssub.s32 1024, 1024
      %48 = vsyncadd [#allocation6], %s47
      %s49 = sshll.u32 [#allocation7], 4
      %s50 = int_to_ptr.vmem [resolvable:$true] %s49
      %55 = dma.hbm_to_vmem [thread:$0]  %s3, 1024, %s50, [#allocation6], 64, 64, 4
    $region17: #{tpu_custom_call.1} parent=1 // pred_fallthru
      _
    // Predicated region
    $region18: #{tpu_custom_call.1} parent=1 // pred_check
      _
    $region19: #{tpu_custom_call.1} parent=1 // pred_check_branch
      %57 = sbr.rel (0) target = $region21
    $region20: #{tpu_custom_call.1} parent=1 // pred_region
      _
    $region21: #{tpu_custom_call.1} parent=1 // pred_fallthru
      _
    // Predicated region
    $region22: #{tpu_custom_call.1} parent=1 // pred_check
      _
    $region23: #{tpu_custom_call.1} parent=1 // pred_check_branch
      %59 = sbr.rel (0) target = $region25
    $region24: #{tpu_custom_call.1} parent=1 // pred_region
      %s61 = ssub.s32 2048, 2048
      %62 = vsyncadd [#allocation9], %s61
      %s63 = sshll.u32 [#allocation8], 4
      %s64 = int_to_ptr.vmem [resolvable:$true] %s63
      %69 = dma.hbm_to_vmem [thread:$0]  %s5, 2048, %s64, [#allocation9], 128, 128, 8
    $region25: #{tpu_custom_call.1} parent=1 // pred_fallthru
      _
    // Predicated region
    $region26: #{tpu_custom_call.1} parent=1 // pred_check
      _
    $region27: #{tpu_custom_call.1} parent=1 // pred_check_branch
      %71 = sbr.rel (0) target = $region29
    $region28: #{tpu_custom_call.1} parent=1 // pred_region
      _
    $region29: #{tpu_custom_call.1} parent=1 // pred_fallthru
      _
    // Predicated region
    $region30: #{tpu_custom_call.1} parent=1 // pred_check
      _
    $region31: #{tpu_custom_call.1} parent=1 // pred_check_branch
      %73 = sbr.rel (0) target = $region33
    $region32: #{tpu_custom_call.1} parent=1 // pred_region
      _
    $region33: #{tpu_custom_call.1} parent=1 // pred_fallthru
      _
    // Predicated region
    $region34: #{tpu_custom_call.1} parent=1 // pred_check
      _
    $region35: #{tpu_custom_call.1} parent=1 // pred_check_branch
      %75 = sbr.rel (0) target = $region37
    $region36: #{tpu_custom_call.1} parent=1 // pred_region
      _
    $region37: #{tpu_custom_call.1} parent=1 // pred_fallthru
      _
    // Predicated region
    $region38: #{tpu_custom_call.1} parent=1 // pred_check
      _
    $region39: #{tpu_custom_call.1} parent=1 // pred_check_branch
      %77 = sbr.rel (0) target = $region41
    $region40: #{tpu_custom_call.1} parent=1 // pred_region
      %78 = dma.done [#allocation3], 128
    $region41: #{tpu_custom_call.1} parent=1 // pred_fallthru
      _
    // Predicated region
    $region42: #{tpu_custom_call.1} parent=1 // pred_check
      _
    $region43: #{tpu_custom_call.1} parent=1 // pred_check_branch
      %80 = sbr.rel (0) target = $region45
    $region44: #{tpu_custom_call.1} parent=1 // pred_region
      %81 = dma.done [#allocation6], 256
    $region45: #{tpu_custom_call.1} parent=1 // pred_fallthru
      _
    // Predicated region
    $region46: #{tpu_custom_call.1} parent=1 // pred_check
      _
    $region47: #{tpu_custom_call.1} parent=1 // pred_check_branch
      %83 = sbr.rel (0) target = $region49
    $region48: #{tpu_custom_call.1} parent=1 // pred_region
      %84 = dma.done [#allocation6], 1024
    $region49: #{tpu_custom_call.1} parent=1 // pred_fallthru
      _
    // Predicated region
    $region50: #{tpu_custom_call.1} parent=1 // pred_check
      _
    $region51: #{tpu_custom_call.1} parent=1 // pred_check_branch
      %86 = sbr.rel (0) target = $region53
    $region52: #{tpu_custom_call.1} parent=1 // pred_region
      %87 = dma.done [#allocation9], 2048
    $region53: #{tpu_custom_call.1} parent=1 // pred_fallthru
      _
    %v89 = vld [vmem:[#allocation2] sm:$0xf]
    %v90 = vld [vmem:[#allocation2 + $0x4] sm:$0xf]
    %v91 = vld [vmem:[#allocation5] sm:$0xf]
    %v92 = vld [vmem:[#allocation5 + $0x4] sm:$0xf]
    %v93 = vld [vmem:[#allocation5 + $0x8] sm:$0xf]
    %v94 = vld [vmem:[#allocation5 + $0xc] sm:$0xf]
    %v95 = vld [vmem:[%s2] sm:$0x1]
    %v97 = vlaneseq
    %v98 = vshrl.u32 %v97, 7
    %v99 = vsub.s32 0, %v98
    %v100 = vrot.slane %v95, %v99
    %v104 = vunpack.c.l.b16 %v89
    %v105 = vunpack.c.l.b16 %v90
    %v106 = vpack.c.b16 %v105, %v104
    %v111 = vunpack.c.l.b16 %v91
    %v112 = vunpack.c.l.b16 %v92
    %v113 = vunpack.c.l.b16 %v93
    %v114 = vunpack.c.l.b16 %v94
    %v115 = vpack.c.b16 %v112, %v111
    %v116 = vpack.c.b16 %v114, %v113
    %vm119 = vcmask 261120
    %v121 = vsel %vm119, %v106, 0
    %123 = vmatprep.subr.bf16.mxu0 0
    %124 = vmatpush1.bf16.msra.mxu0 %v115
    %125 = vmatprep.subr.bf16.mxu0 0
    %126 = vmatpush1.bf16.msra.mxu0 %v116
    %127 = vmatprep.subr.bf16.mxu0 0
    %128 = vmatpush1.bf16.msra.mxu0 0
    %129 = vmatprep.subr.bf16.mxu0 0
    %130 = vmatpush1.bf16.msra.mxu0 0
    %131 = vmatprep.subr.bf16.mxu0 0
    %132 = vmatpush1.bf16.msra.mxu0 0
    %133 = vmatprep.subr.bf16.mxu0 0
    %134 = vmatpush1.bf16.msra.mxu0 0
    %135 = vmatprep.subr.bf16.mxu0 0
    %136 = vmatpush1.bf16.msra.mxu0 0
    %137 = vmatprep.subr.bf16.mxu0 0
    %138 = vmatpush1.bf16.msra.mxu0 0
    %139 = vmatprep.subr.bf16.mxu0 0
    %140 = vmatpush1.bf16.msra.mxu0 0
    %141 = vmatprep.subr.bf16.mxu0 0
    %142 = vmatpush1.bf16.msra.mxu0 0
    %143 = vmatprep.subr.bf16.mxu0 0
    %144 = vmatpush1.bf16.msra.mxu0 0
    %145 = vmatprep.subr.bf16.mxu0 0
    %146 = vmatpush1.bf16.msra.mxu0 0
    %147 = vmatprep.subr.bf16.mxu0 0
    %148 = vmatpush1.bf16.msra.mxu0 0
    %149 = vmatprep.subr.bf16.mxu0 0
    %150 = vmatpush1.bf16.msra.mxu0 0
    %151 = vmatprep.subr.bf16.mxu0 0
    %152 = vmatpush1.bf16.msra.mxu0 0
    %153 = vmatprep.subr.bf16.mxu0 0
    %154 = vmatpush1.bf16.msra.mxu0 0
    %155 = vmatprep.mubr.bf16.mxu0 0
    %156 = vmatmul.mubr.bf16.gmra.mrb[0].mxu0 %v121
    %v157 = vpop.f32.mrb[0].mxu0
    %v158 = vadd.f32 %v100, %v157
    %v159 = vpop.f32.mrb[0].mxu0
    %v160 = vpop.f32.mrb[0].mxu0
    %v161 = vadd.f32 %v100, %v160
    %v162 = vpop.f32.mrb[0].mxu0
    %163 = vdwg.mxu0
    %v164 = vmax.f32 %v158, 0.0
    %v165 = vmax.f32 %v161, 0.0
    %v166 = vpack.c.bf16 %v165, %v164
    %v167 = vld [vmem:[#allocation7] sm:$0xf]
    %v168 = vld [vmem:[#allocation7 + $0x4] sm:$0xf]
    %v169 = vld [vmem:[#allocation7 + $0x8] sm:$0xf]
    %v170 = vld [vmem:[#allocation7 + $0xc] sm:$0xf]
    %v171 = vld [vmem:[#allocation7 + $0x10] sm:$0xf]
    %v172 = vld [vmem:[#allocation7 + $0x14] sm:$0xf]
    %v173 = vld [vmem:[#allocation7 + $0x18] sm:$0xf]
    %v174 = vld [vmem:[#allocation7 + $0x1c] sm:$0xf]
    %v175 = vld [vmem:[#allocation7 + $0x20] sm:$0xf]
    %v176 = vld [vmem:[#allocation7 + $0x24] sm:$0xf]
    %v177 = vld [vmem:[#allocation7 + $0x28] sm:$0xf]
    %v178 = vld [vmem:[#allocation7 + $0x2c] sm:$0xf]
    %v179 = vld [vmem:[#allocation7 + $0x30] sm:$0xf]
    %v180 = vld [vmem:[#allocation7 + $0x34] sm:$0xf]
    %v181 = vld [vmem:[#allocation7 + $0x38] sm:$0xf]
    %v182 = vld [vmem:[#allocation7 + $0x3c] sm:$0xf]
    %v183 = vld [vmem:[%s4] sm:$0x1]
    %v185 = vlaneseq
    %v186 = vshrl.u32 %v185, 7
    %v187 = vsub.s32 0, %v186
    %v188 = vrot.slane %v183, %v187
    %v206 = vunpack.c.l.b16 %v167
    %v207 = vunpack.c.l.b16 %v168
    %v208 = vunpack.c.l.b16 %v169
    %v209 = vunpack.c.l.b16 %v170
    %v210 = vunpack.c.l.b16 %v171
    %v211 = vunpack.c.l.b16 %v172
    %v212 = vunpack.c.l.b16 %v173
    %v213 = vunpack.c.l.b16 %v174
    %v214 = vunpack.c.l.b16 %v175
    %v215 = vunpack.c.l.b16 %v176
    %v216 = vunpack.c.l.b16 %v177
    %v217 = vunpack.c.l.b16 %v178
    %v218 = vunpack.c.l.b16 %v179
    %v219 = vunpack.c.l.b16 %v180
    %v220 = vunpack.c.l.b16 %v181
    %v221 = vunpack.c.l.b16 %v182
    %v222 = vpack.c.b16 %v207, %v206
    %v223 = vpack.c.b16 %v209, %v208
    %v224 = vpack.c.b16 %v211, %v210
    %v225 = vpack.c.b16 %v213, %v212
    %v226 = vpack.c.b16 %v215, %v214
    %v227 = vpack.c.b16 %v217, %v216
    %v228 = vpack.c.b16 %v219, %v218
    %v229 = vpack.c.b16 %v221, %v220
    %238 = vmatprep.subr.bf16.mxu0 0
    %239 = vmatpush1.bf16.msra.mxu0 %v222
    %240 = vmatprep.subr.bf16.mxu0 0
    %241 = vmatpush1.bf16.msra.mxu0 %v223
    %242 = vmatprep.subr.bf16.mxu0 0
    %243 = vmatpush1.bf16.msra.mxu0 %v224
    %244 = vmatprep.subr.bf16.mxu0 0
    %245 = vmatpush1.bf16.msra.mxu0 %v225
    %246 = vmatprep.subr.bf16.mxu0 0
    %247 = vmatpush1.bf16.msra.mxu0 %v226
    %248 = vmatprep.subr.bf16.mxu0 0
    %249 = vmatpush1.bf16.msra.mxu0 %v227
    %250 = vmatprep.subr.bf16.mxu0 0
    %251 = vmatpush1.bf16.msra.mxu0 %v228
    %252 = vmatprep.subr.bf16.mxu0 0
    %253 = vmatpush1.bf16.msra.mxu0 %v229
    %254 = vmatprep.subr.bf16.mxu0 0
    %255 = vmatpush1.bf16.msra.mxu0 0
    %256 = vmatprep.subr.bf16.mxu0 0
    %257 = vmatpush1.bf16.msra.mxu0 0
    %258 = vmatprep.subr.bf16.mxu0 0
    %259 = vmatpush1.bf16.msra.mxu0 0
    %260 = vmatprep.subr.bf16.mxu0 0
    %261 = vmatpush1.bf16.msra.mxu0 0
    %262 = vmatprep.subr.bf16.mxu0 0
    %263 = vmatpush1.bf16.msra.mxu0 0
    %264 = vmatprep.subr.bf16.mxu0 0
    %265 = vmatpush1.bf16.msra.mxu0 0
    %266 = vmatprep.subr.bf16.mxu0 0
    %267 = vmatpush1.bf16.msra.mxu0 0
    %268 = vmatprep.subr.bf16.mxu0 0
    %269 = vmatpush1.bf16.msra.mxu0 0
    %270 = vmatprep.mubr.bf16.mxu0 0
    %271 = vmatmul.mubr.bf16.gmra.mrb[0].mxu0 %v166
    %v272 = vpop.f32.mrb[0].mxu0
    %v273 = vadd.f32 %v188, %v272
    %v274 = vpop.f32.mrb[0].mxu0
    %v275 = vpop.f32.mrb[0].mxu0
    %v276 = vadd.f32 %v188, %v275
    %v277 = vpop.f32.mrb[0].mxu0
    %278 = vdwg.mxu0
    %v279 = vmax.f32 %v273, 0.0
    %v280 = vmax.f32 %v276, 0.0
    %v281 = vpack.c.bf16 %v280, %v279
    %v282 = vld [vmem:[#allocation8] sm:$0xff]
    %v283 = vld [vmem:[#allocation8 + $0x8] sm:$0xff]
    %v284 = vld [vmem:[#allocation8 + $0x10] sm:$0xff]
    %v285 = vld [vmem:[#allocation8 + $0x18] sm:$0xff]
    %v286 = vld [vmem:[#allocation8 + $0x20] sm:$0xff]
    %v287 = vld [vmem:[#allocation8 + $0x28] sm:$0xff]
    %v288 = vld [vmem:[#allocation8 + $0x30] sm:$0xff]
    %v289 = vld [vmem:[#allocation8 + $0x38] sm:$0xff]
    %v290 = vld [vmem:[#allocation8 + $0x40] sm:$0xff]
    %v291 = vld [vmem:[#allocation8 + $0x48] sm:$0xff]
    %v292 = vld [vmem:[#allocation8 + $0x50] sm:$0xff]
    %v293 = vld [vmem:[#allocation8 + $0x58] sm:$0xff]
    %v294 = vld [vmem:[#allocation8 + $0x60] sm:$0xff]
    %v295 = vld [vmem:[#allocation8 + $0x68] sm:$0xff]
    %v296 = vld [vmem:[#allocation8 + $0x70] sm:$0xff]
    %v297 = vld [vmem:[#allocation8 + $0x78] sm:$0xff]
    %v298 = vld [vmem:[%s6] sm:$0x3]
    %v300 = vlaneseq
    %v301 = vshrl.u32 %v300, 7
    %v302 = vsub.s32 0, %v301
    %v303 = vrot.slane %v298, %v302
    %v304 = vlaneseq
    %v305 = vshrl.u32 %v304, 7
    %v306 = vsub.s32 1, %v305
    %v307 = vrot.slane %v298, %v306
    %v326 = vunpack.c.l.b16 %v282
    %v327 = vunpack.c.h.b16 %v282
    %v328 = vunpack.c.l.b16 %v283
    %v329 = vunpack.c.h.b16 %v283
    %v330 = vunpack.c.l.b16 %v284
    %v331 = vunpack.c.h.b16 %v284
    %v332 = vunpack.c.l.b16 %v285
    %v333 = vunpack.c.h.b16 %v285
    %v334 = vunpack.c.l.b16 %v286
    %v335 = vunpack.c.h.b16 %v286
    %v336 = vunpack.c.l.b16 %v287
    %v337 = vunpack.c.h.b16 %v287
    %v338 = vunpack.c.l.b16 %v288
    %v339 = vunpack.c.h.b16 %v288
    %v340 = vunpack.c.l.b16 %v289
    %v341 = vunpack.c.h.b16 %v289
    %v342 = vunpack.c.l.b16 %v290
    %v343 = vunpack.c.h.b16 %v290
    %v344 = vunpack.c.l.b16 %v291
    %v345 = vunpack.c.h.b16 %v291
    %v346 = vunpack.c.l.b16 %v292
    %v347 = vunpack.c.h.b16 %v292
    %v348 = vunpack.c.l.b16 %v293
    %v349 = vunpack.c.h.b16 %v293
    %v350 = vunpack.c.l.b16 %v294
    %v351 = vunpack.c.h.b16 %v294
    %v352 = vunpack.c.l.b16 %v295
    %v353 = vunpack.c.h.b16 %v295
    %v354 = vunpack.c.l.b16 %v296
    %v355 = vunpack.c.h.b16 %v296
    %v356 = vunpack.c.l.b16 %v297
    %v357 = vunpack.c.h.b16 %v297
    %v358 = vpack.c.b16 %v328, %v326
    %v359 = vpack.c.b16 %v329, %v327
    %v360 = vpack.c.b16 %v332, %v330
    %v361 = vpack.c.b16 %v333, %v331
    %v362 = vpack.c.b16 %v336, %v334
    %v363 = vpack.c.b16 %v337, %v335
    %v364 = vpack.c.b16 %v340, %v338
    %v365 = vpack.c.b16 %v341, %v339
    %v366 = vpack.c.b16 %v344, %v342
    %v367 = vpack.c.b16 %v345, %v343
    %v368 = vpack.c.b16 %v348, %v346
    %v369 = vpack.c.b16 %v349, %v347
    %v370 = vpack.c.b16 %v352, %v350
    %v371 = vpack.c.b16 %v353, %v351
    %v372 = vpack.c.b16 %v356, %v354
    %v373 = vpack.c.b16 %v357, %v355
    %390 = vmatprep.subr.bf16.mxu0 %v359
    %391 = vmatpush1.bf16.msra.mxu0 %v358
    %392 = vmatprep.subr.bf16.mxu0 %v361
    %393 = vmatpush1.bf16.msra.mxu0 %v360
    %394 = vmatprep.subr.bf16.mxu0 %v363
    %395 = vmatpush1.bf16.msra.mxu0 %v362
    %396 = vmatprep.subr.bf16.mxu0 %v365
    %397 = vmatpush1.bf16.msra.mxu0 %v364
    %398 = vmatprep.subr.bf16.mxu0 %v367
    %399 = vmatpush1.bf16.msra.mxu0 %v366
    %400 = vmatprep.subr.bf16.mxu0 %v369
    %401 = vmatpush1.bf16.msra.mxu0 %v368
    %402 = vmatprep.subr.bf16.mxu0 %v371
    %403 = vmatpush1.bf16.msra.mxu0 %v370
    %404 = vmatprep.subr.bf16.mxu0 %v373
    %405 = vmatpush1.bf16.msra.mxu0 %v372
    %406 = vmatprep.subr.bf16.mxu0 0
    %407 = vmatpush1.bf16.msra.mxu0 0
    %408 = vmatprep.subr.bf16.mxu0 0
    %409 = vmatpush1.bf16.msra.mxu0 0
    %410 = vmatprep.subr.bf16.mxu0 0
    %411 = vmatpush1.bf16.msra.mxu0 0
    %412 = vmatprep.subr.bf16.mxu0 0
    %413 = vmatpush1.bf16.msra.mxu0 0
    %414 = vmatprep.subr.bf16.mxu0 0
    %415 = vmatpush1.bf16.msra.mxu0 0
    %416 = vmatprep.subr.bf16.mxu0 0
    %417 = vmatpush1.bf16.msra.mxu0 0
    %418 = vmatprep.subr.bf16.mxu0 0
    %419 = vmatpush1.bf16.msra.mxu0 0
    %420 = vmatprep.subr.bf16.mxu0 0
    %421 = vmatpush1.bf16.msra.mxu0 0
    %422 = vmatprep.mubr.bf16.mxu0 0
    %423 = vmatmul.mubr.bf16.gmra.mrb[0].mxu0 %v281
    %v424 = vpop.f32.mrb[0].mxu0
    %v425 = vadd.f32 %v303, %v424
    %v426 = vpop.f32.mrb[0].mxu0
    %v427 = vadd.f32 %v307, %v426
    %v428 = vpop.f32.mrb[0].mxu0
    %v429 = vadd.f32 %v303, %v428
    %v430 = vpop.f32.mrb[0].mxu0
    %v431 = vadd.f32 %v307, %v430
    %432 = vdwg.mxu0
    %v433 = vmax.f32 %v427, 0.0
    %v434 = vmax.f32 %v431, 0.0
    %v435 = vld [vmem:[%s7] sm:$0x1]
    %v437 = vlaneseq
    %v438 = vshrl.u32 %v437, 7
    %v439 = vsub.s32 0, %v438
    %v440 = vrot.slane %v435, %v439
    %v442 = vmul.f32 %v433, %v440
    %v443 = vmul.f32 %v434, %v440
    %444 = vadd.xlane.f32.xlu0 %v442
    %v445 = vpop.xlane.xlu0 %444
    %446 = vadd.xlane.f32.xlu0 %v443
    %v447 = vpop.xlane.xlu0 %446
    %v448 = vlaneseq
    %v449 = vand.u32 %v448, 127
    %vm450 = vcmp.eq.s32.totalorder %v449, 4
    %v451 = vsel %vm450, %v445, %v425
    %v452 = vsel %vm450, %v447, %v429
    %v453 = vld [vmem:[%s8] sm:$0x1]
    %v455 = vlaneseq
    %v456 = vshrl.u32 %v455, 7
    %v457 = vsub.s32 0, %v456
    %v458 = vrot.slane %v453, %v457
    %v460 = vadd.f32 %v451, %v458
    %v461 = vadd.f32 %v452, %v458
    %v462 = vpack.c.bf16 %v461, %v460
    %v464 = vunpack.c.l.b16 %v462
    %v465 = vunpack.c.h.b16 %v462
    %v466 = vpack.c.b16 %v464, %v464
    %v467 = vpack.c.b16 %v465, %v465
    %470 = vst [vmem:[#allocation10] sm:$0xf] %v466
    %471 = vst [vmem:[#allocation10 + $0x4] sm:$0xf] %v467
    // Predicated region
    $region54: #{tpu_custom_call.1} parent=1 // pred_check
      _
    $region55: #{tpu_custom_call.1} parent=1 // pred_check_branch
      %473 = sbr.rel (0) target = $region57
    $region56: #{tpu_custom_call.1} parent=1 // pred_region
      %s475 = ssub.s32 128, 128
      %476 = vsyncadd [#allocation4], %s475
      %s477 = sshll.u32 [#allocation10], 4
      %s478 = int_to_ptr.vmem [resolvable:$true] %s477
      %483 = dma.vmem_to_hbm [thread:$0]  %s478, 128, %s9, [#allocation4], 64, 64, 4
    $region57: #{tpu_custom_call.1} parent=1 // pred_fallthru
      _
    // Predicated region
    $region58: #{tpu_custom_call.1} parent=1 // pred_check
      _
    $region59: #{tpu_custom_call.1} parent=1 // pred_check_branch
      %485 = sbr.rel (0) target = $region61
    $region60: #{tpu_custom_call.1} parent=1 // pred_region
      %486 = dma.done [#allocation4], 128
    $region61: #{tpu_custom_call.1} parent=1 // pred_fallthru
      _
    %487 = vsyncpa [#allocation3], 1
    %488 = vsyncpa [#allocation6], 1
    %489 = vsyncpa [#allocation9], 1
    %490 = vsyncpa [#allocation4], 1

</llo_original>
